<compile_context>
chip_gen: v7x
topology: tpu7x:2x2x1
jax: 0.10.0
libtpu: 0.0.40
codegen_flags: <defaults>
</compile_context>

<pallas_src>
import functools

import jax
import jax.numpy as jnp
from jax.experimental import pallas as pl
from jax.experimental.pallas import tpu as pltpu


# ---------------------------------------------------------------------------
# Pallas kernels
# ---------------------------------------------------------------------------
def _conv1x1_kernel(x_ref, w_ref, b_ref, o_ref, *, cast_bf16):
    # x_ref: (Cin, T) pixels-on-lanes; w_ref: (Cout, Cin); b_ref: (Cout, 1).
    x = x_ref[...]
    w = w_ref[...]
    if cast_bf16:
        # Production-size channels: bf16 MXU operands (v6e/v7x native),
        # f32 accumulation.
        x = x.astype(jnp.bfloat16)
        w = w.astype(jnp.bfloat16)
    acc = jnp.dot(w, x, preferred_element_type=jnp.float32)
    acc = acc + b_ref[...]                       # broadcast over lanes
    o_ref[...] = jnp.maximum(acc, 0.0).astype(o_ref.dtype)


def _mean_kernel(*refs):
    # refs = (level_0, ..., level_{L-1}, out); every block is (TR, TK).
    out_ref = refs[-1]
    ins = refs[:-1]
    acc = ins[0][...].astype(jnp.float32)
    for r in ins[1:]:
        acc = acc + r[...].astype(jnp.float32)
    out_ref[...] = (acc * (1.0 / len(ins))).astype(out_ref.dtype)


def _add_kernel(a_ref, b_ref, o_ref):
    o_ref[...] = a_ref[...] + b_ref[...]


def _upsample_add_kernel(b_ref, x_ref, uh_ref, uw_ref, o_ref, *, tc):
    # b_ref: (TC, Hg, Wg) bsf tile; x_ref/o_ref: (TC, Hi, Wi) conv/out tile.
    # uh_ref: (Hi, Hg), uw_ref: (Wg, Wi) 0/1 nearest-neighbour expansion
    # matrices (exact selection, so the two dots introduce no rounding beyond
    # the operand format).  Resample is fused: no residual tensor hits HBM.
    uh = uh_ref[...]
    uw = uw_ref[...]
    for t in range(tc):                          # static unroll over channels
        row = jnp.dot(b_ref[t], uw, preferred_element_type=jnp.float32)
        up = jnp.dot(uh, row, preferred_element_type=jnp.float32)
        o_ref[t] = (up + x_ref[t]).astype(o_ref.dtype)


# ---------------------------------------------------------------------------
# Tiling helpers
# ---------------------------------------------------------------------------
def _round_up(x, m):
    return -(-x // m) * m


def _conv_hw_tiling(hw):
    """Return (hw_pad, lane_tile) for the conv pixel axis.

    Big maps get >=512-lane tiles (pad to a 512 multiple if needed); tiny
    levels get padded to one 128-multiple block so stores stay lane-dense.
    """
    for cand in (1024, 512):
        if hw % cand == 0:
            return hw, cand
    if hw >= 512:
        hw_pad = _round_up(hw, 512)
        return hw_pad, 512
    hw_pad = max(128, _round_up(hw, 128))
    return hw_pad, hw_pad


def _k_tile(k):
    """Lane tile for the flat elementwise kernels: a lane-dense 128-multiple
    when one divides k, else the full (untiled) width (always legal)."""
    for cand in (2048, 1024, 512, 256, 128):
        if k % cand == 0:
            return cand
    return k


def _row_tile(r, k, n_bufs, budget_bytes=8 << 20):
    """Row tile: a multiple of 8 dividing r (full r if r % 8 != 0), sized so
    n_bufs double-buffered f32 blocks stay well under the scoped-VMEM budget
    (8 MiB keeps v5e's 16 MiB default safe), and small enough to leave >=2
    grid steps when possible (v7x megacore)."""
    if r % 8 != 0:
        return r
    max_rows = max(8, budget_bytes // max(1, k * 4 * 2 * n_bufs))
    cap = min(max_rows, r if r < 16 else r // 2)
    best = 8
    d = 8
    while d <= cap:
        if r % d == 0:
            best = d
        d += 8
    return best


def _channel_tile(c, n, hi, wi, hg, wg, budget_bytes=8 << 20):
    """Channel tile for the fused upsample+add kernel (VMEM-bounded, and keep
    >=2 grid steps so both v7x TensorCores get work)."""
    per_ch = (2 * hi * wi + hg * wg) * 4 * 2     # x + out + bsf, double-buffered
    cap = min(c, 8)
    if n == 1 and c >= 2:
        cap = min(cap, max(1, c // 2))
    best = 1
    for tc in range(1, cap + 1):
        if c % tc == 0 and tc * per_ch <= budget_bytes:
            best = tc
    return best


def _nearest_expand_matrix(n_out, n_in, dtype=jnp.float32):
    """(n_out, n_in) 0/1 matrix; row i selects source index floor(i*n_in/n_out)
    (F.interpolate(mode='nearest') index rule; == i // s for integer factors)."""
    src = (jnp.arange(n_out) * n_in) // n_out
    return (src[:, None] == jnp.arange(n_in)[None, :]).astype(dtype)


# ---------------------------------------------------------------------------
# Pallas wrappers
# ---------------------------------------------------------------------------
def conv1x1_bias_relu(x_nchw, w_oi, b):
    """ConvModule(in, out, kernel_size=1): 1x1 conv + bias + ReLU.

    w_oi: (Cout, Cin) (PyTorch conv weight layout squeezed), b: (Cout,).
    Channel-on-sublane / pixel-on-lane layout; no NCHW<->NHWC transposes.
    Padded pixels produce relu(bias) and are sliced off below.
    """
    n, cin, h, wd = x_nchw.shape
    cout = w_oi.shape[0]
    hw = h * wd
    x3d = x_nchw.reshape(n, cin, hw)

    hw_pad, t = _conv_hw_tiling(hw)
    if hw_pad != hw:
        x3d = jnp.pad(x3d, ((0, 0), (0, 0), (0, hw_pad - hw)))

    # bf16 MXU operands only pay off at production channel counts; at the
    # demo's tiny Cin/Cout the MXU is <1% utilized either way, keep f32.
    cast_bf16 = (cin >= 128 and cout >= 128)
    kernel = functools.partial(_conv1x1_kernel, cast_bf16=cast_bf16)

    out3d = pl.pallas_call(
        kernel,
        out_shape=jax.ShapeDtypeStruct((n, cout, hw_pad), x_nchw.dtype),
        grid=(n, hw_pad // t),
        in_specs=[
            pl.BlockSpec((pl.Squeezed(), cin, t), lambda i, j: (i, 0, j)),
            pl.BlockSpec((cout, cin), lambda i, j: (0, 0)),
            pl.BlockSpec((cout, 1), lambda i, j: (0, 0)),
        ],
        out_specs=pl.BlockSpec((pl.Squeezed(), cout, t), lambda i, j: (i, 0, j)),
        compiler_params=pltpu.CompilerParams(
            dimension_semantics=("parallel", "parallel")),
    )(x3d, w_oi, b.reshape(cout, 1))

    if hw_pad != hw:
        out3d = out3d[:, :, :hw]
    return out3d.reshape(n, cout, h, wd)


def pallas_mean_levels(feats):
    """Mean over a list of same-shaped NCHW tensors (no stack, row+lane tiled)."""
    n, c, h, w = feats[0].shape
    r, k = n * c, h * w
    flats = [f.reshape(r, k) for f in feats]
    tk = _k_tile(k)
    tr = _row_tile(r, tk, n_bufs=len(feats) + 1)
    out2d = pl.pallas_call(
        _mean_kernel,
        out_shape=jax.ShapeDtypeStruct((r, k), flats[0].dtype),
        grid=(r // tr, k // tk),
        in_specs=[pl.BlockSpec((tr, tk), lambda i, j: (i, j)) for _ in flats],
        out_specs=pl.BlockSpec((tr, tk), lambda i, j: (i, j)),
        compiler_params=pltpu.CompilerParams(
            dimension_semantics=("parallel", "parallel")),
    )(*flats)
    return out2d.reshape(n, c, h, w)


def pallas_add(a, b):
    """Elementwise residual add (NCHW, same shapes), row+lane tiled."""
    n, c, h, w = a.shape
    r, k = n * c, h * w
    tk = _k_tile(k)
    tr = _row_tile(r, tk, n_bufs=3)
    out2d = pl.pallas_call(
        _add_kernel,
        out_shape=jax.ShapeDtypeStruct((r, k), a.dtype),
        grid=(r // tr, k // tk),
        in_specs=[
            pl.BlockSpec((tr, tk), lambda i, j: (i, j)),
            pl.BlockSpec((tr, tk), lambda i, j: (i, j)),
        ],
        out_specs=pl.BlockSpec((tr, tk), lambda i, j: (i, j)),
        compiler_params=pltpu.CompilerParams(
            dimension_semantics=("parallel", "parallel")),
    )(a.reshape(r, k), b.reshape(r, k))
    return out2d.reshape(n, c, h, w)


def pallas_upsample_add(bsf, x):
    """out = F.interpolate(bsf, x.shape[2:], mode='nearest') + x, with the
    nearest-neighbour expansion fused into the add kernel (two tiny 0/1
    matmuls in-kernel) so the full-resolution residual never touches HBM."""
    n, c, hg, wg = bsf.shape
    _, _, hi, wi = x.shape
    uh = _nearest_expand_matrix(hi, hg).astype(x.dtype)       # (Hi, Hg)
    uw = _nearest_expand_matrix(wi, wg).astype(x.dtype).T     # (Wg, Wi)
    tc = _channel_tile(c, n, hi, wi, hg, wg)
    kernel = functools.partial(_upsample_add_kernel, tc=tc)
    return pl.pallas_call(
        kernel,
        out_shape=jax.ShapeDtypeStruct(x.shape, x.dtype),
        grid=(n, c // tc),
        in_specs=[
            pl.BlockSpec((pl.Squeezed(), tc, hg, wg), lambda i, j: (i, j, 0, 0)),
            pl.BlockSpec((pl.Squeezed(), tc, hi, wi), lambda i, j: (i, j, 0, 0)),
            pl.BlockSpec((hi, hg), lambda i, j: (0, 0)),
            pl.BlockSpec((wg, wi), lambda i, j: (0, 0)),
        ],
        out_specs=pl.BlockSpec((pl.Squeezed(), tc, hi, wi),
                               lambda i, j: (i, j, 0, 0)),
        compiler_params=pltpu.CompilerParams(
            dimension_semantics=("parallel", "parallel")),
    )(bsf, x, uh, uw)


# ---------------------------------------------------------------------------
# Spatial resampling glue (plain JAX; exact-factor FPN pyramid assumed)
# ---------------------------------------------------------------------------
def adaptive_max_pool_int(x, out_hw):
    # Matches F.adaptive_max_pool2d exactly when H % Ho == 0 and W % Wo == 0.
    n, c, h, w = x.shape
    ho, wo = out_hw
    assert h % ho == 0 and w % wo == 0
    sh, sw = h // ho, w // wo
    return x.reshape(n, c, ho, sh, wo, sw).max(axis=(3, 5))


def nearest_resize_up(x, out_hw):
    # Matches F.interpolate(mode='nearest') exactly for integer upscale factors.
    n, c, h, w = x.shape
    ho, wo = out_hw
    assert ho % h == 0 and wo % w == 0
    sh, sw = ho // h, wo // w
    return jnp.repeat(jnp.repeat(x, sh, axis=2), sw, axis=3)


# ---------------------------------------------------------------------------
# BFP forward (refine_type=None path)
# ---------------------------------------------------------------------------
def bfp_forward(inputs, weights, biases, refine_level):
    num_levels = len(inputs)
    # per-level 1x1 ConvModule (Pallas matmul kernel, channel-on-sublane)
    inputs = [conv1x1_bias_relu(x, w, b)
              for x, w, b in zip(inputs, weights, biases)]

    gather_size = inputs[refine_level].shape[2:]
    feats = []
    for i in range(num_levels):
        if i < refine_level:
            feats.append(adaptive_max_pool_int(inputs[i], gather_size))
        else:
            feats.append(nearest_resize_up(inputs[i], gather_size))

    bsf = pallas_mean_levels(feats)  # sum(feats)/len(feats)

    outs = []
    for i in range(num_levels):
        out_size = inputs[i].shape[2:]
        if i < refine_level:
            # Fused: nearest-upsampled residual computed in-kernel from the
            # small gather-resolution bsf (no HBM residual tensor).
            outs.append(pallas_upsample_add(bsf, inputs[i]))
        else:
            residual = adaptive_max_pool_int(bsf, out_size)
            outs.append(pallas_add(residual, inputs[i]))

    # F.max_pool2d(outs[-1], kernel_size=1, stride=2, padding=0) == strided view
    outs.append(outs[-1][:, :, ::2, ::2])
    return outs


# ---------------------------------------------------------------------------
# Pure-JAX reference (numerical sanity check)
# ---------------------------------------------------------------------------
def bfp_reference(inputs, weights, biases, refine_level):
    num_levels = len(inputs)
    conv = [jnp.maximum(
        jnp.einsum("oc,nchw->nohw", w, x) + b[None, :, None, None], 0.0)
        for x, w, b in zip(inputs, weights, biases)]
    gather_size = conv[refine_level].shape[2:]
    feats = []
    for i in range(num_levels):
        if i < refine_level:
            feats.append(adaptive_max_pool_int(conv[i], gather_size))
        else:
            feats.append(nearest_resize_up(conv[i], gather_size))
    bsf = sum(feats) / len(feats)
    outs = []
    for i in range(num_levels):
        out_size = conv[i].shape[2:]
        if i < refine_level:
            residual = nearest_resize_up(bsf, out_size)
        else:
            residual = adaptive_max_pool_int(bsf, out_size)
        outs.append(residual + conv[i])
    outs.append(outs[-1][:, :, ::2, ::2])
    return outs


# ---------------------------------------------------------------------------
# Demo
# ---------------------------------------------------------------------------
if __name__ == "__main__":
    key = jax.random.PRNGKey(0)

    in_channels_list = [4, 6, 8, 4]
    out_channels = 8
    refine_level = 2
    batch = 2
    spatials = [16, 8, 4, 2]  # standard FPN power-of-two pyramid

    num_levels = len(in_channels_list)
    keys = jax.random.split(key, 3 * num_levels)

    # Deterministic params: xavier-uniform conv weights as (Cout, Cin) and
    # NONZERO biases (exercises the bias + pad-then-slice path in the check).
    weights, biases = [], []
    for lvl, cin in enumerate(in_channels_list):
        bound = (6.0 / (cin + out_channels)) ** 0.5
        w = jax.random.uniform(keys[lvl], (out_channels, cin),
                               minval=-bound, maxval=bound, dtype=jnp.float32)
        b = jax.random.uniform(keys[num_levels + lvl], (out_channels,),
                               minval=-0.5, maxval=0.5, dtype=jnp.float32)
        weights.append(w)
        biases.append(b)

    # Inputs: NCHW feature pyramid.
    inputs = []
    for lvl, (cin, s) in enumerate(zip(in_channels_list, spatials)):
        x = jax.random.normal(keys[2 * num_levels + lvl],
                              (batch, cin, s, s), dtype=jnp.float32)
        inputs.append(x)

    outs = bfp_forward(inputs, weights, biases, refine_level)
    outs = jax.block_until_ready(outs)

    expected_shapes = [(batch, out_channels, s, s) for s in spatials]
    expected_shapes.append((batch, out_channels, spatials[-1] // 2 or 1,
                            spatials[-1] // 2 or 1))
    assert len(outs) == num_levels + 1
    for o, es in zip(outs, expected_shapes):
        assert o.shape == es, (o.shape, es)

    # Numerical check vs a plain-JAX reference (tolerance leaves headroom for
    # MXU f32 pass rounding but catches bias / padding / resample bugs).
    refs = bfp_reference(inputs, weights, biases, refine_level)
    for o, rf in zip(outs, refs):
        assert jnp.allclose(o, rf, rtol=5e-3, atol=5e-3), "numerical mismatch"

    print("KERNEL_OK")
</pallas_src>

<mosaic_0001>
module attributes {stable_mosaic.version = 11 : i64} {
  func.func @_conv1x1_kernel(%arg0: i32, %arg1: i32, %arg2: memref<1x4x256xf32, #tpu.memory_space<vmem>>, %arg3: memref<8x4xf32, #tpu.memory_space<vmem>>, %arg4: memref<8x1xf32, #tpu.memory_space<vmem>>, %arg5: memref<1x8x256xf32, #tpu.memory_space<vmem>>) attributes {dimension_semantics = [#tpu.dimension_semantics<parallel>, #tpu.dimension_semantics<parallel>], iteration_bounds = array<i64: 2, 1>, scalar_prefetch = 0 : i64, scratch_operands = 0 : i64, tpu.core_type = #tpu.core_type<tc>, window_params = [{transform_indices = @transform_0, window_bounds = array<i64: 1, 4, 256>}, {pipeline_mode = #tpu.pipeline_mode<synchronous>, transform_indices = @transform_1, window_bounds = array<i64: 8, 4>}, {pipeline_mode = #tpu.pipeline_mode<synchronous>, transform_indices = @transform_2, window_bounds = array<i64: 8, 1>}, {transform_indices = @transform_3, window_bounds = array<i64: 1, 8, 256>}]} {
    %c0 = arith.constant 0 : index
    %c0_0 = arith.constant 0 : index
    %c0_1 = arith.constant 0 : index
    %0 = vector.load %arg2[%c0, %c0_0, %c0_1] : memref<1x4x256xf32, #tpu.memory_space<vmem>>, vector<1x4x256xf32>
    %1 = vector.shape_cast %0 : vector<1x4x256xf32> to vector<4x256xf32>
    %c0_2 = arith.constant 0 : index
    %c0_3 = arith.constant 0 : index
    %2 = vector.load %arg3[%c0_2, %c0_3] : memref<8x4xf32, #tpu.memory_space<vmem>>, vector<8x4xf32>
    %cst = arith.constant dense<0.000000e+00> : vector<8x256xf32>
    %3 = tpu.matmul %2, %1, %cst {dimension_numbers = #tpu.dot_dimension_numbers<[1], [0], [0], [1], [0, 0, 1, 1], [], []>} : vector<8x4xf32>, vector<4x256xf32>, vector<8x256xf32> -> vector<8x256xf32>
    %c0_4 = arith.constant 0 : index
    %c0_5 = arith.constant 0 : index
    %4 = vector.load %arg4[%c0_4, %c0_5] : memref<8x1xf32, #tpu.memory_space<vmem>>, vector<8x1xf32>
    %5 = vector.broadcast %4 : vector<8x1xf32> to vector<8x256xf32>
    %6 = arith.addf %3, %5 : vector<8x256xf32>
    %cst_6 = arith.constant 0.000000e+00 : f32
    %7 = vector.broadcast %cst_6 : f32 to vector<8x256xf32>
    %8 = arith.maximumf %6, %7 : vector<8x256xf32>
    %c0_7 = arith.constant 0 : index
    %c0_8 = arith.constant 0 : index
    %c0_9 = arith.constant 0 : index
    %9 = vector.load %arg5[%c0_7, %c0_8, %c0_9] : memref<1x8x256xf32, #tpu.memory_space<vmem>>, vector<1x8x256xf32>
    %10 = vector.shape_cast %9 : vector<1x8x256xf32> to vector<8x256xf32>
    %11 = vector.shape_cast %8 : vector<8x256xf32> to vector<1x8x256xf32>
    tpu.vector_store %arg5[%c0_7, %c0_8, %c0_9], %11 {strides = array<i32>} : memref<1x8x256xf32, #tpu.memory_space<vmem>>, vector<1x8x256xf32>,
    return
  }
  func.func @transform_0(%arg0: i32, %arg1: i32) -> (i32, i32, i32) {
    %c0_i32 = arith.constant 0 : i32
    %c0_i32_0 = arith.constant 0 : i32
    return %arg0, %c0_i32, %arg1 : i32, i32, i32
  }
  func.func @transform_1(%arg0: i32, %arg1: i32) -> (i32, i32) {
    %c0_i32 = arith.constant 0 : i32
    %c0_i32_0 = arith.constant 0 : i32
    %c0_i32_1 = arith.constant 0 : i32
    return %c0_i32, %c0_i32_0 : i32, i32
  }
  func.func @transform_2(%arg0: i32, %arg1: i32) -> (i32, i32) {
    %c0_i32 = arith.constant 0 : i32
    %c0_i32_0 = arith.constant 0 : i32
    %c0_i32_1 = arith.constant 0 : i32
    return %c0_i32, %c0_i32_0 : i32, i32
  }
  func.func @transform_3(%arg0: i32, %arg1: i32) -> (i32, i32, i32) {
    %c0_i32 = arith.constant 0 : i32
    %c0_i32_0 = arith.constant 0 : i32
    return %arg0, %c0_i32, %arg1 : i32, i32, i32
  }
}

</mosaic_0001>

<llo_original>
// kernel: tpu_custom_call.1
$region0: #{tpu_custom_call.1}
  #allocation0 [shape = 'u32[]', space=smem, size = 0x4, offset = 0x4, fixed_abs, tag = 'smem constant byte address 0x4 - core index']
  #allocation1 [shape = 'u32[144,128]{1,0:T(1,128)}', space=vmem, size = 0x12000, scoped, tag = 'internal scratch']
  %s0 = inlined_call_operand.vmem [shape: f32[2,4,256], index: 0, kind: input, shape index: {}]
  %s1 = inlined_call_operand.vmem [shape: f32[8,4], index: 1, kind: input, shape index: {}]
  %s2 = inlined_call_operand.vmem [shape: f32[8,1], index: 2, kind: input, shape index: {}]
  %s3 = inlined_call_operand.hbm [shape: f32[2,8,256], index: 3, kind: output, shape index: {}]
  %s4 = sld [smem:[#allocation0]]
  $region45: #{tpu_custom_call.1} parent=0
    _
  %s6 = ssub.s32 1, %s4
  %s7 = scalar_select 0, %s6, %s4
  $region1: #{tpu_custom_call.1} parent=0
    #allocation2 [shape = 'u8[16384]{0}', space=vmem, size = 0x4000, scoped, tag = 'output window, operand 0']
    #allocation3 [shape = 's32[2]{0}', space=sflag, size = 0x8, scoped, tag = 'scoped memory for tpu_custom_call.1']
    %8 = vsyncpa [#allocation3], 0
    %s9 = scalar_lea.sflag [#allocation3], 1
    %10 = vsyncpa %s9, 0
    loop: start=0, step=1, limit=4
    $region2: #{tpu_custom_call.1} parent=1 // loop_pre_header
      _
    $region3: #{tpu_custom_call.1} parent=1 // loop_header
      %s12 = sphi 0, %s16
      %p13 = scmp.ge.s32.totalorder %s12, 4
      %s19 = sphi 0, %s31
      %s20 = sphi 0, %s27
      %s21 = sphi 0, %s19
      %s22 = sphi 0, %s20
      %s23 = sphi 0, %s21
      %s24 = sphi 0, %s22
      %s36 = sphi 0, %s38
      %s39 = sphi 0, %s36
      %s40 = sphi 0, %s39
      %s56 = sphi 0, %s40
      %s60 = sphi 0, %s60
      %s62 = sphi 0, %s60
      %s63 = sphi 0, %s62
      %s77 = sphi 0, %s63
      %s81 = sphi 0, %s81
      %s83 = sphi 0, %s81
      %s84 = sphi 0, %s83
      %s98 = sphi 0, %s84
      %s106 = sphi 0, %s108
      %s109 = sphi 0, %s106
      %s110 = sphi 0, %s109
      %s126 = sphi 0, %s110
    $region4: #{tpu_custom_call.1} parent=1 // loop_header_branch
      %15 = sbr.rel (%p13) target = $region8
    $region5: #{tpu_custom_call.1} parent=1 // loop_body
      %s17 = ssub.s32 %s12, 1
      %s18 = ssub.s32 %s12, 2
      %s25 = sadd.s32 1, %s20
      %p26 = scmp.ge.s32.totalorder %s25, 1
      %s27 = scalar_select %p26, 0, %s25
      %s28 = sadd.s32 1, %s19
      %s29 = scalar_select %p26, %s28, %s19
      %p30 = scmp.ge.s32.totalorder %s29, 2
      %s31 = scalar_select %p30, 0, %s29
      %s32 = ssub.s32 %s19, %s31
      %s33 = ssub.s32 %s20, %s27
      %s34 = sor.u32 %s32, %s33
      %p35 = scmp.eq.s32.totalorder %s34, 0
      %s37 = sadd.s32 %s36, 1
      %s38 = scalar_select %p35, %s36, %s37
      %p41 = pneg %p35
      %p42 = scmp.eq.s32.totalorder %s12, 1
      %p43 = por %p41, %p42
      %p44 = scmp.ne.s32.totalorder %s36, %s39
      %p45 = scmp.eq.s32.totalorder %s12, 0
      %p46 = por %p44, %p45
      %p47 = scmp.ne.s32.totalorder %s36, %s39
      %p48 = scmp.eq.s32.totalorder %s17, 1
      %p49 = por %p47, %p48
      %p50 = scmp.ne.s32.totalorder %s39, %s40
      %p51 = scmp.eq.s32.totalorder %s17, 0
      %p52 = por %p50, %p51
      %p53 = scmp.ne.s32.totalorder %s39, %s40
      %p54 = scmp.eq.s32.totalorder %s18, 1
      %p55 = por %p53, %p54
      %p57 = scmp.ne.s32.totalorder %s40, %s56
      %p58 = scmp.eq.s32.totalorder %s18, 0
      %p59 = por %p57, %p58
      %s61 = sadd.s32 %s60, 1
      %p64 = scmp.eq.s32.totalorder %s12, 1
      %p65 = scmp.ne.s32.totalorder %s60, %s62
      %p66 = scmp.eq.s32.totalorder %s12, 0
      %p67 = por %p65, %p66
      %p68 = scmp.ne.s32.totalorder %s60, %s62
      %p69 = scmp.eq.s32.totalorder %s17, 1
      %p70 = por %p68, %p69
      %p71 = scmp.ne.s32.totalorder %s62, %s63
      %p72 = scmp.eq.s32.totalorder %s17, 0
      %p73 = por %p71, %p72
      %p74 = scmp.ne.s32.totalorder %s62, %s63
      %p75 = scmp.eq.s32.totalorder %s18, 1
      %p76 = por %p74, %p75
      %p78 = scmp.ne.s32.totalorder %s63, %s77
      %p79 = scmp.eq.s32.totalorder %s18, 0
      %p80 = por %p78, %p79
      %s82 = sadd.s32 %s81, 1
      %p85 = scmp.eq.s32.totalorder %s12, 1
      %p86 = scmp.ne.s32.totalorder %s81, %s83
      %p87 = scmp.eq.s32.totalorder %s12, 0
      %p88 = por %p86, %p87
      %p89 = scmp.ne.s32.totalorder %s81, %s83
      %p90 = scmp.eq.s32.totalorder %s17, 1
      %p91 = por %p89, %p90
      %p92 = scmp.ne.s32.totalorder %s83, %s84
      %p93 = scmp.eq.s32.totalorder %s17, 0
      %p94 = por %p92, %p93
      %p95 = scmp.ne.s32.totalorder %s83, %s84
      %p96 = scmp.eq.s32.totalorder %s18, 1
      %p97 = por %p95, %p96
      %p99 = scmp.ne.s32.totalorder %s84, %s98
      %p100 = scmp.eq.s32.totalorder %s18, 0
      %p101 = por %p99, %p100
      %s102 = ssub.s32 %s19, %s31
      %s103 = ssub.s32 %s20, %s27
      %s104 = sor.u32 %s102, %s103
      %p105 = scmp.eq.s32.totalorder %s104, 0
      %s107 = sadd.s32 %s106, 1
      %s108 = scalar_select %p105, %s106, %s107
      %p111 = pneg %p105
      %p112 = scmp.eq.s32.totalorder %s12, 1
      %p113 = por %p111, %p112
      %p114 = scmp.ne.s32.totalorder %s106, %s109
      %p115 = scmp.eq.s32.totalorder %s12, 0
      %p116 = por %p114, %p115
      %p117 = scmp.ne.s32.totalorder %s106, %s109
      %p118 = scmp.eq.s32.totalorder %s17, 1
      %p119 = por %p117, %p118
      %p120 = scmp.ne.s32.totalorder %s109, %s110
      %p121 = scmp.eq.s32.totalorder %s17, 0
      %p122 = por %p120, %p121
      %p123 = scmp.ne.s32.totalorder %s109, %s110
      %p124 = scmp.eq.s32.totalorder %s18, 1
      %p125 = por %p123, %p124
      %p127 = scmp.ne.s32.totalorder %s110, %s126
      %p128 = scmp.eq.s32.totalorder %s18, 0
      %p129 = por %p127, %p128
      %p130 = scmp.le.s32.totalorder 1, %s12
      %p131 = scmp.lt.s32.totalorder %s12, 3
      %p132 = pnand %p130, %p131
      %p133 = pneg %p132
      // Predicated region
      $region9: #{tpu_custom_call.1} parent=5 // pred_check
        _
      $region10: #{tpu_custom_call.1} parent=5 // pred_check_branch
        %135 = sbr.rel (%p132) target = $region12
      $region11: #{tpu_custom_call.1} parent=5 // pred_region
        %s136 = ssub.s32 %s12, 1
        // Predicated region
        $region13: #{tpu_custom_call.1} parent=11 // pred_check
          %p137 = pneg %p73
        $region14: #{tpu_custom_call.1} parent=11 // pred_check_branch
          %139 = sbr.rel (%p137) target = $region16
        $region15: #{tpu_custom_call.1} parent=11 // pred_region
          _
        $region16: #{tpu_custom_call.1} parent=11 // pred_fallthru
          _
        // Predicated region
        $region17: #{tpu_custom_call.1} parent=11 // pred_check
          %p140 = pneg %p94
        $region18: #{tpu_custom_call.1} parent=11 // pred_check_branch
          %142 = sbr.rel (%p140) target = $region20
        $region19: #{tpu_custom_call.1} parent=11 // pred_region
          _
        $region20: #{tpu_custom_call.1} parent=11 // pred_fallthru
          _
      $region12: #{tpu_custom_call.1} parent=5 // pred_fallthru
        _
      %p143 = scmp.lt.s32.totalorder %s12, 2
      // Predicated region
      $region21: #{tpu_custom_call.1} parent=5 // pred_check
        %p144 = pneg %p143
      $region22: #{tpu_custom_call.1} parent=5 // pred_check_branch
        %146 = sbr.rel (%p144) target = $region24
      $region23: #{tpu_custom_call.1} parent=5 // pred_region
        // Predicated region
        $region25: #{tpu_custom_call.1} parent=23 // pred_check
          %p147 = pneg %p46
        $region26: #{tpu_custom_call.1} parent=23 // pred_check_branch
          %149 = sbr.rel (%p147) target = $region28
        $region27: #{tpu_custom_call.1} parent=23 // pred_region
          %s150 = smul.u32 2, %s20
          %p151 = scmp.lt.s32.totalorder %s19, 1
          %s152 = scalar_select %p151, %s19, 1
          %p153 = scmp.lt.s32.totalorder %s150, 1
          %s154 = scalar_select %p153, %s150, 1
          %s155 = smul.addr %s152, 2
          %s156 = sadd.s32 %s154, %s155
          %s157 = smul.addr %s156, 4
          %s158 = scalar_lea.vmem %s0, %s157
          %s159 = smul.u32 2, %s20
        $region28: #{tpu_custom_call.1} parent=23 // pred_fallthru
          _
      $region24: #{tpu_custom_call.1} parent=5 // pred_fallthru
        _
      %p160 = scmp.le.s32.totalorder 1, %s12
      %p161 = scmp.lt.s32.totalorder %s12, 3
      %p162 = pnand %p160, %p161
      %p163 = pneg %p162
      // Predicated region
      $region29: #{tpu_custom_call.1} parent=5 // pred_check
        _
      $region30: #{tpu_custom_call.1} parent=5 // pred_check_branch
        %165 = sbr.rel (%p162) target = $region32
      $region31: #{tpu_custom_call.1} parent=5 // pred_region
        %s166 = ssub.s32 %s12, 1
        %s167 = smul.u32 2, %s22
        %p168 = scmp.lt.s32.totalorder %s21, 1
        %s169 = scalar_select %p168, %s21, 1
        %p170 = scmp.lt.s32.totalorder %s167, 1
        %s171 = scalar_select %p170, %s167, 1
        %s172 = smul.addr %s169, 2
        %s173 = sadd.s32 %s171, %s172
        %s174 = smul.addr %s173, 4
        %s175 = scalar_lea.vmem %s0, %s174
        %p176 = pneg %p52
        %p177 = pneg %p49
        %p178 = pneg %p73
        %p179 = pneg %p70
        %p180 = pneg %p94
        %p181 = pneg %p91
        %p182 = pneg %p122
        %p183 = pneg %p119
        %s184 = sand.u32 %s109, 1
        %s185 = scalar_lea.sflag [#allocation3], %s184
        %s186 = sand.u32 %s109, 1
        %s187 = smul.addr %s186, 16
        %s188 = scalar_lea.vmem [#allocation2], %s187
        %s189 = smul.u32 2, %s22
        %p190 = scmp.lt.s32.totalorder %s21, 1
        %s191 = scalar_select %p190, %s21, 1
        %p192 = scmp.lt.s32.totalorder %s189, 1
        %s193 = scalar_select %p192, %s189, 1
        %s194 = smul.addr %s191, 2
        %s195 = sadd.s32 %s193, %s194
        %s196 = smul.addr %s195, 4
        %s197 = scalar_lea.vmem %s0, %s196
        %s198 = smul.u32 2, %s22
        %s199 = smul.u32 2, %s22
        %v200 = vld [vmem:[%s197] sm:$0xff]
        %v201 = vld [vmem:[%s1] sm:$0xff]
        %v202 = vld [vmem:[%s2] sm:$0xff]
        %204 = vset.pattern.permute.xlu0 0
        %205 = vperm.xlu0 %204, %v202
        %v206 = vpop.permute.xlu0 %205
        %v209 = vcombine.high %v200, %v200
        %vm210 = vcmask 31744
        %v212 = vsel %vm210, %v201, 0
        %vm214 = vcmask 1043456
        %v215 = vsel %vm214, %v200, 0
        %v217 = vsel %vm214, %v209, 0
        %219 = vmatprep.subr.mxu0 %v217
        %220 = vmatpush1.msra.mxu0 %v215
        %221 = vmatprep.subr.mxu0 0.0
        %222 = vmatpush1.msra.mxu0 0.0
        %223 = vmatprep.subr.mxu0 0.0
        %224 = vmatpush1.msra.mxu0 0.0
        %225 = vmatprep.subr.mxu0 0.0
        %226 = vmatpush1.msra.mxu0 0.0
        %227 = vmatprep.subr.mxu0 0.0
        %228 = vmatpush1.msra.mxu0 0.0
        %229 = vmatprep.subr.mxu0 0.0
        %230 = vmatpush1.msra.mxu0 0.0
        %231 = vmatprep.subr.mxu0 0.0
        %232 = vmatpush1.msra.mxu0 0.0
        %233 = vmatprep.subr.mxu0 0.0
        %234 = vmatpush1.msra.mxu0 0.0
        %235 = vmatprep.subr.mxu0 0.0
        %236 = vmatpush1.msra.mxu0 0.0
        %237 = vmatprep.subr.mxu0 0.0
        %238 = vmatpush1.msra.mxu0 0.0
        %239 = vmatprep.subr.mxu0 0.0
        %240 = vmatpush1.msra.mxu0 0.0
        %241 = vmatprep.subr.mxu0 0.0
        %242 = vmatpush1.msra.mxu0 0.0
        %243 = vmatprep.subr.mxu0 0.0
        %244 = vmatpush1.msra.mxu0 0.0
        %245 = vmatprep.subr.mxu0 0.0
        %246 = vmatpush1.msra.mxu0 0.0
        %247 = vmatprep.subr.mxu0 0.0
        %248 = vmatpush1.msra.mxu0 0.0
        %249 = vmatprep.subr.mxu0 0.0
        %250 = vmatpush1.msra.mxu0 0.0
        %251 = vmatprep.subr.mxu0 0.0
        %252 = vmatpush1.msra.mxu0 0.0
        %253 = vmatprep.subr.mxu0 0.0
        %254 = vmatpush1.msra.mxu0 0.0
        %255 = vmatprep.subr.mxu0 0.0
        %256 = vmatpush1.msra.mxu0 0.0
        %257 = vmatprep.subr.mxu0 0.0
        %258 = vmatpush1.msra.mxu0 0.0
        %259 = vmatprep.subr.mxu0 0.0
        %260 = vmatpush1.msra.mxu0 0.0
        %261 = vmatprep.subr.mxu0 0.0
        %262 = vmatpush1.msra.mxu0 0.0
        %263 = vmatprep.subr.mxu0 0.0
        %264 = vmatpush1.msra.mxu0 0.0
        %265 = vmatprep.subr.mxu0 0.0
        %266 = vmatpush1.msra.mxu0 0.0
        %267 = vmatprep.subr.mxu0 0.0
        %268 = vmatpush1.msra.mxu0 0.0
        %269 = vmatprep.subr.mxu0 0.0
        %270 = vmatpush1.msra.mxu0 0.0
        %271 = vmatprep.subr.mxu0 0.0
        %272 = vmatpush1.msra.mxu0 0.0
        %273 = vmatprep.subr.mxu0 0.0
        %274 = vmatpush1.msra.mxu0 0.0
        %275 = vmatprep.subr.mxu0 0.0
        %276 = vmatpush1.msra.mxu0 0.0
        %277 = vmatprep.subr.mxu0 0.0
        %278 = vmatpush1.msra.mxu0 0.0
        %279 = vmatprep.subr.mxu0 0.0
        %280 = vmatpush1.msra.mxu0 0.0
        %281 = vmatprep.subr.mxu0 0.0
        %282 = vmatpush1.msra.mxu0 0.0
        %283 = vmatprep.mubr.f32.mxu0 0.0
        %284 = vmatmul.mubr.f32.gmra.mrb[0].mxu0 %v212
        %v285 = vpop.f32.mrb[0].mxu0
        %v286 = vadd.f32 %v206, %v285
        %v287 = vpop.f32.mrb[0].mxu0
        %v288 = vadd.f32 %v206, %v287
        %289 = vdwg.mxu0
        %v290 = vmax.f32 %v286, 0.0
        %v291 = vmax.f32 %v288, 0.0
        %292 = vst [vmem:[%s188] sm:$0xff] %v290
        %293 = vst [vmem:[%s188 + $0x8] sm:$0xff] %v291
        %s294 = sand.u32 %s109, 1
        %s295 = scalar_lea.sflag [#allocation3], %s294
        %s296 = sand.u32 %s109, 1
        %s297 = smul.addr %s296, 16
        %s298 = scalar_lea.vmem [#allocation2], %s297
        // Predicated region
        $region33: #{tpu_custom_call.1} parent=31 // pred_check
          %p299 = pneg %p119
        $region34: #{tpu_custom_call.1} parent=31 // pred_check_branch
          %301 = sbr.rel (%p299) target = $region36
        $region35: #{tpu_custom_call.1} parent=31 // pred_region
          %s302 = smul.u32 2, %s22
          %s304 = ssub.s32 256, 256
          %305 = vsyncadd %s295, %s304
          %s306 = smul.addr %s21, 2
          %s307 = sadd.s32 %s302, %s306
          %s308 = smul.addr %s307, 128
          %s309 = scalar_lea.hbm %s3, %s308
          %s311 = sshll.u32 %s298, 4
          %s312 = int_to_ptr.vmem [resolvable:$true] %s311
          %314 = dma.vmem_to_hbm [thread:$0]  %s312, 256, %s309, %s295
        $region36: #{tpu_custom_call.1} parent=31 // pred_fallthru
          _
      $region32: #{tpu_custom_call.1} parent=5 // pred_fallthru
        _
      %p315 = scmp.le.s32.totalorder 2, %s12
      // Predicated region
      $region37: #{tpu_custom_call.1} parent=5 // pred_check
        %p316 = pneg %p315
      $region38: #{tpu_custom_call.1} parent=5 // pred_check_branch
        %318 = sbr.rel (%p316) target = $region40
      $region39: #{tpu_custom_call.1} parent=5 // pred_region
        %s319 = ssub.s32 %s12, 2
        // Predicated region
        $region41: #{tpu_custom_call.1} parent=39 // pred_check
          %p320 = pneg %p125
        $region42: #{tpu_custom_call.1} parent=39 // pred_check_branch
          %322 = sbr.rel (%p320) target = $region44
        $region43: #{tpu_custom_call.1} parent=39 // pred_region
          %s323 = sand.u32 %s110, 1
          %s324 = scalar_lea.sflag [#allocation3], %s323
          %s325 = sand.u32 %s110, 1
          %s326 = smul.addr %s325, 16
          %s327 = scalar_lea.vmem [#allocation2], %s326
          %328 = dma.done %s324, 256
        $region44: #{tpu_custom_call.1} parent=39 // pred_fallthru
          _
      $region40: #{tpu_custom_call.1} parent=5 // pred_fallthru
        _
    $region6: #{tpu_custom_call.1} parent=1 // loop_footer
      %s16 = sadd.s32 1, %s12
    $region7: #{tpu_custom_call.1} parent=1 // loop_footer_branch
      %11 = sbr.rel target = $region3
    $region8: #{tpu_custom_call.1} parent=1 // loop_exit
      _
    %329 = vsyncpa [#allocation3], 1
    %s330 = scalar_lea.sflag [#allocation3], 1
    %331 = vsyncpa %s330, 1

</llo_original>
